<compile_context>
chip_gen: v5e
topology: v5e:2x2
jax: 0.10.0
libtpu: 0.0.40
codegen_flags: <defaults>
</compile_context>

<pallas_src>
import jax
import jax.numpy as jnp
from jax.experimental import pallas as pl
from jax.experimental.pallas import tpu as pltpu

EMB_DIM = 300   # fc1 in_features
HID = 150       # fc1 / fc2 out_features

LANE = 128
SUBLANE = 8


def _round_up(x, m):
    return (x + m - 1) // m * m


def _fused_kernel(tok_ref, emb_ref, w1_ref, b1_ref, w2_ref, b2_ref,
                  w3_ref, b3_ref, out_ref):
    """Embedding-mean + 3-layer MLP, fully fused in one Pallas program.

    tok_ref : [Bt, S]    int32 token ids
    emb_ref : [VP, EP]   zero-padded embedding table
    w1_ref  : [EP, HP]   zero-padded fc1 weight, stored [in, out]
    w2_ref  : [HP, HP]   zero-padded fc2 weight
    w3_ref  : [1, HP]    fc3 weight as a zero-padded row
    b*_ref  : zero-padded biases, [1, out]
    out_ref : [Bt, 128]  lane-dense output slab (result lives in column 0)
    """
    tok = tok_ref[...]                                   # [Bt, S] int32
    Bt, S = tok.shape
    VP = emb_ref.shape[0]

    # ---- embedding gather + mean, fused as a one-hot/count MXU matmul ----
    # counts[b, v] = (# of positions s with tok[b, s] == v) / S
    vocab_ids = jax.lax.broadcasted_iota(jnp.int32, (Bt, S, VP), 2)
    onehot = (tok[:, :, None] == vocab_ids).astype(jnp.float32)      # [Bt, S, VP]
    counts = jnp.sum(onehot, axis=1) * (1.0 / S)                     # [Bt, VP]
    # TODO(synk): for large vocab / long sequences, replace the one-hot build
    # with a chunked or DMA-gather path; at these sizes the MXU matmul wins.
    # mean-of-embeddings == counts @ emb_table
    x = jnp.dot(counts, emb_ref[...],
                preferred_element_type=jnp.float32)                  # [Bt, EP]

    # ---- fc1 + relu, fc2 + relu (f32 accumulate; padded lanes stay 0) ----
    h1 = jnp.dot(x, w1_ref[...], preferred_element_type=jnp.float32) + b1_ref[...]
    h1 = jnp.maximum(h1, 0.0)                                        # [Bt, HP]
    h2 = jnp.dot(h1, w2_ref[...], preferred_element_type=jnp.float32) + b2_ref[...]
    h2 = jnp.maximum(h2, 0.0)                                        # [Bt, HP]

    # ---- fc3 (out_features=1): VPU multiply + row reduce, no N=1 matmul ---
    out = jnp.sum(h2 * w3_ref[...], axis=-1, keepdims=True) + b3_ref[...]  # [Bt, 1]

    # lane-dense store; wrapper slices column 0
    out_ref[...] = jnp.broadcast_to(out, out_ref.shape).astype(out_ref.dtype)


def pack_params(emb_table, w1, b1, w2, b2, w3, b3):
    """One-time, init-style transform: zero-pad all parameters to lane-dense
    shapes so the per-call forward does no weight reshaping/padding."""
    V, E = emb_table.shape
    H = w1.shape[1]
    VP = _round_up(V, LANE)    # contraction dim of the counts matmul
    EP = _round_up(E, LANE)    # 300 -> 384
    HP = _round_up(H, LANE)    # 150 -> 256

    emb_p = jnp.zeros((VP, EP), jnp.float32).at[:V, :E].set(emb_table)
    w1_p = jnp.zeros((EP, HP), jnp.float32).at[:E, :H].set(w1)
    b1_p = jnp.zeros((1, HP), jnp.float32).at[:, :H].set(b1.reshape(1, -1))
    w2_p = jnp.zeros((HP, HP), jnp.float32).at[:H, :H].set(w2)
    b2_p = jnp.zeros((1, HP), jnp.float32).at[:, :H].set(b2.reshape(1, -1))
    w3_row = jnp.zeros((1, HP), jnp.float32).at[:, :H].set(w3.reshape(1, -1))
    b3_p = jnp.asarray(b3, jnp.float32).reshape(1, 1)
    return (emb_p, w1_p, b1_p, w2_p, b2_p, w3_row, b3_p)


@jax.jit
def baseline_forward(data, packed):
    """data: [B, S] int32 token ids; packed = pack_params(...).
    Returns [B, 1] float32."""
    emb_p, w1_p, b1_p, w2_p, b2_p, w3_row, b3_p = packed
    B, S = data.shape
    VP, EP = emb_p.shape
    HP = w1_p.shape[1]

    # Batch tiling: parallel grid over batch blocks (weights pinned).  At the
    # toy B used here this is a single program; at larger B it pipelines and
    # can shard across both v7x TensorCores.
    B_TILE = min(_round_up(B, SUBLANE), 128)
    B_pad = _round_up(B, B_TILE)
    if B_pad != B:
        data = jnp.pad(data, ((0, B_pad - B), (0, 0)))   # padded rows sliced off
    n_blocks = B_pad // B_TILE

    def pinned(shape):
        ndim = len(shape)
        return pl.BlockSpec(shape, lambda i, _n=ndim: (0,) * _n)

    out_padded = pl.pallas_call(
        _fused_kernel,
        out_shape=jax.ShapeDtypeStruct((B_pad, LANE), jnp.float32),
        grid=(n_blocks,),
        in_specs=[
            pl.BlockSpec((B_TILE, S), lambda i: (i, 0)),   # token ids
            pinned((VP, EP)),                              # embedding table
            pinned((EP, HP)), pinned((1, HP)),             # fc1
            pinned((HP, HP)), pinned((1, HP)),             # fc2
            pinned((1, HP)), pinned((1, 1)),               # fc3 row weight + bias
        ],
        out_specs=pl.BlockSpec((B_TILE, LANE), lambda i: (i, 0)),
        compiler_params=pltpu.CompilerParams(
            dimension_semantics=("parallel",)),
    )(data, emb_p, w1_p, b1_p, w2_p, b2_p, w3_row, b3_p)

    return out_padded[:B, :1]


def baseline_reference(data, emb_table, w1, b1, w2, b2, w3, b3):
    # Pure-JAX reference (mirrors the PyTorch forward exactly).
    x = jnp.take(emb_table, data, axis=0)
    x = jnp.mean(x.astype(jnp.float32), axis=1)
    x = jnp.maximum(x @ w1 + b1, 0.0)
    x = jnp.maximum(x @ w2 + b2, 0.0)
    return x @ w3 + b3


if __name__ == "__main__":
    key = jax.random.PRNGKey(0)
    k_emb, k_data, kw1, kb1, kw2, kb2, kw3, kb3 = jax.random.split(key, 8)

    # Small, module-consistent shapes.
    B, S, VOCAB = 8, 8, 64

    emb_table = jax.random.normal(k_emb, (VOCAB, EMB_DIM), dtype=jnp.float32) * 0.1
    w1 = jax.random.normal(kw1, (EMB_DIM, HID), dtype=jnp.float32) * 0.05
    b1 = jax.random.normal(kb1, (1, HID), dtype=jnp.float32) * 0.01
    w2 = jax.random.normal(kw2, (HID, HID), dtype=jnp.float32) * 0.05
    b2 = jax.random.normal(kb2, (1, HID), dtype=jnp.float32) * 0.01
    w3 = jax.random.normal(kw3, (HID, 1), dtype=jnp.float32) * 0.05
    b3 = jax.random.normal(kb3, (1, 1), dtype=jnp.float32) * 0.01

    # Integer token ids, shape [B, S].
    data = jax.random.randint(k_data, (B, S), 0, VOCAB, dtype=jnp.int32)

    packed = pack_params(emb_table, w1, b1, w2, b2, w3, b3)
    out = baseline_forward(data, packed)
    out = jax.block_until_ready(out)

    ref = baseline_reference(data, emb_table, w1, b1, w2, b2, w3, b3)
    assert out.shape == (B, 1), out.shape
    assert jnp.allclose(out, ref, atol=1e-5, rtol=1e-5), (out, ref)

    print("KERNEL_OK")
</pallas_src>

<mosaic_0001>
module attributes {stable_mosaic.version = 11 : i64} {
  func.func @_fused_kernel(%arg0: i32, %arg1: memref<8x8xi32, #tpu.memory_space<vmem>>, %arg2: memref<128x384xf32, #tpu.memory_space<vmem>>, %arg3: memref<384x256xf32, #tpu.memory_space<vmem>>, %arg4: memref<1x256xf32, #tpu.memory_space<vmem>>, %arg5: memref<256x256xf32, #tpu.memory_space<vmem>>, %arg6: memref<1x256xf32, #tpu.memory_space<vmem>>, %arg7: memref<1x256xf32, #tpu.memory_space<vmem>>, %arg8: memref<1x1xf32, #tpu.memory_space<vmem>>, %arg9: memref<8x128xf32, #tpu.memory_space<vmem>>) attributes {dimension_semantics = [#tpu.dimension_semantics<parallel>], iteration_bounds = array<i64: 1>, scalar_prefetch = 0 : i64, scratch_operands = 0 : i64, tpu.core_type = #tpu.core_type<tc>, window_params = [{transform_indices = @transform_0, window_bounds = array<i64: 8, 8>}, {pipeline_mode = #tpu.pipeline_mode<synchronous>, transform_indices = @transform_1, window_bounds = array<i64: 128, 384>}, {pipeline_mode = #tpu.pipeline_mode<synchronous>, transform_indices = @transform_2, window_bounds = array<i64: 384, 256>}, {pipeline_mode = #tpu.pipeline_mode<synchronous>, transform_indices = @transform_3, window_bounds = array<i64: 1, 256>}, {pipeline_mode = #tpu.pipeline_mode<synchronous>, transform_indices = @transform_4, window_bounds = array<i64: 256, 256>}, {pipeline_mode = #tpu.pipeline_mode<synchronous>, transform_indices = @transform_5, window_bounds = array<i64: 1, 256>}, {pipeline_mode = #tpu.pipeline_mode<synchronous>, transform_indices = @transform_6, window_bounds = array<i64: 1, 256>}, {pipeline_mode = #tpu.pipeline_mode<synchronous>, transform_indices = @transform_7, window_bounds = array<i64: 1, 1>}, {transform_indices = @transform_8, window_bounds = array<i64: 8, 128>}]} {
    %c0 = arith.constant 0 : index
    %c0_0 = arith.constant 0 : index
    %0 = vector.load %arg1[%c0, %c0_0] : memref<8x8xi32, #tpu.memory_space<vmem>>, vector<8x8xi32>
    %1 = tpu.iota {dimensions = array<i32: 2>} : vector<8x8x128xi32>
    %2 = vector.shape_cast %0 : vector<8x8xi32> to vector<8x8x1xi32>
    %3 = vector.broadcast %2 : vector<8x8x1xi32> to vector<8x8x128xi32>
    %4 = arith.cmpi eq, %3, %1 : vector<8x8x128xi32>
    %5 = arith.extui %4 : vector<8x8x128xi1> to vector<8x8x128xi32>
    %6 = arith.sitofp %5 : vector<8x8x128xi32> to vector<8x8x128xf32>
    %cst = arith.constant dense<0.000000e+00> : vector<8x128xf32>
    %7 = vector.multi_reduction <add>, %6, %cst [1] : vector<8x8x128xf32> to vector<8x128xf32>
    %cst_1 = arith.constant 1.250000e-01 : f32
    %8 = vector.broadcast %cst_1 : f32 to vector<8x128xf32>
    %9 = arith.mulf %7, %8 : vector<8x128xf32>
    %c0_2 = arith.constant 0 : index
    %c0_3 = arith.constant 0 : index
    %10 = vector.load %arg2[%c0_2, %c0_3] : memref<128x384xf32, #tpu.memory_space<vmem>>, vector<128x384xf32>
    %cst_4 = arith.constant dense<0.000000e+00> : vector<8x384xf32>
    %11 = tpu.matmul %9, %10, %cst_4 {dimension_numbers = #tpu.dot_dimension_numbers<[1], [0], [0], [1], [0, 0, 1, 1], [], []>} : vector<8x128xf32>, vector<128x384xf32>, vector<8x384xf32> -> vector<8x384xf32>
    %c0_5 = arith.constant 0 : index
    %c0_6 = arith.constant 0 : index
    %12 = vector.load %arg3[%c0_5, %c0_6] : memref<384x256xf32, #tpu.memory_space<vmem>>, vector<384x256xf32>
    %cst_7 = arith.constant dense<0.000000e+00> : vector<8x256xf32>
    %13 = tpu.matmul %11, %12, %cst_7 {dimension_numbers = #tpu.dot_dimension_numbers<[1], [0], [0], [1], [0, 0, 1, 1], [], []>} : vector<8x384xf32>, vector<384x256xf32>, vector<8x256xf32> -> vector<8x256xf32>
    %c0_8 = arith.constant 0 : index
    %c0_9 = arith.constant 0 : index
    %14 = vector.load %arg4[%c0_8, %c0_9] : memref<1x256xf32, #tpu.memory_space<vmem>>, vector<1x256xf32>
    %15 = vector.broadcast %14 : vector<1x256xf32> to vector<8x256xf32>
    %16 = arith.addf %13, %15 : vector<8x256xf32>
    %cst_10 = arith.constant 0.000000e+00 : f32
    %17 = vector.broadcast %cst_10 : f32 to vector<8x256xf32>
    %18 = arith.maximumf %16, %17 : vector<8x256xf32>
    %c0_11 = arith.constant 0 : index
    %c0_12 = arith.constant 0 : index
    %19 = vector.load %arg5[%c0_11, %c0_12] : memref<256x256xf32, #tpu.memory_space<vmem>>, vector<256x256xf32>
    %cst_13 = arith.constant dense<0.000000e+00> : vector<8x256xf32>
    %20 = tpu.matmul %18, %19, %cst_13 {dimension_numbers = #tpu.dot_dimension_numbers<[1], [0], [0], [1], [0, 0, 1, 1], [], []>} : vector<8x256xf32>, vector<256x256xf32>, vector<8x256xf32> -> vector<8x256xf32>
    %c0_14 = arith.constant 0 : index
    %c0_15 = arith.constant 0 : index
    %21 = vector.load %arg6[%c0_14, %c0_15] : memref<1x256xf32, #tpu.memory_space<vmem>>, vector<1x256xf32>
    %22 = vector.broadcast %21 : vector<1x256xf32> to vector<8x256xf32>
    %23 = arith.addf %20, %22 : vector<8x256xf32>
    %cst_16 = arith.constant 0.000000e+00 : f32
    %24 = vector.broadcast %cst_16 : f32 to vector<8x256xf32>
    %25 = arith.maximumf %23, %24 : vector<8x256xf32>
    %c0_17 = arith.constant 0 : index
    %c0_18 = arith.constant 0 : index
    %26 = vector.load %arg7[%c0_17, %c0_18] : memref<1x256xf32, #tpu.memory_space<vmem>>, vector<1x256xf32>
    %27 = vector.broadcast %26 : vector<1x256xf32> to vector<8x256xf32>
    %28 = arith.mulf %25, %27 : vector<8x256xf32>
    %cst_19 = arith.constant dense<0.000000e+00> : vector<8xf32>
    %29 = vector.multi_reduction <add>, %28, %cst_19 [1] : vector<8x256xf32> to vector<8xf32>
    %30 = vector.shape_cast %29 : vector<8xf32> to vector<8x1xf32>
    %c0_20 = arith.constant 0 : index
    %c0_21 = arith.constant 0 : index
    %31 = vector.load %arg8[%c0_20, %c0_21] : memref<1x1xf32, #tpu.memory_space<vmem>>, vector<1x1xf32>
    %32 = vector.broadcast %31 : vector<1x1xf32> to vector<8x1xf32>
    %33 = arith.addf %30, %32 : vector<8x1xf32>
    %34 = vector.shape_cast %33 : vector<8x1xf32> to vector<8x1xf32>
    %35 = vector.broadcast %34 : vector<8x1xf32> to vector<8x128xf32>
    %c0_22 = arith.constant 0 : index
    %c0_23 = arith.constant 0 : index
    %36 = vector.load %arg9[%c0_22, %c0_23] : memref<8x128xf32, #tpu.memory_space<vmem>>, vector<8x128xf32>
    tpu.vector_store %arg9[%c0_22, %c0_23], %35 {strides = array<i32>} : memref<8x128xf32, #tpu.memory_space<vmem>>, vector<8x128xf32>,
    return
  }
  func.func @transform_0(%arg0: i32) -> (i32, i32) {
    %c0_i32 = arith.constant 0 : i32
    %c0_i32_0 = arith.constant 0 : i32
    return %arg0, %c0_i32 : i32, i32
  }
  func.func @transform_1(%arg0: i32) -> (i32, i32) {
    %c0_i32 = arith.constant 0 : i32
    %c0_i32_0 = arith.constant 0 : i32
    %c0_i32_1 = arith.constant 0 : i32
    return %c0_i32, %c0_i32_0 : i32, i32
  }
  func.func @transform_2(%arg0: i32) -> (i32, i32) {
    %c0_i32 = arith.constant 0 : i32
    %c0_i32_0 = arith.constant 0 : i32
    %c0_i32_1 = arith.constant 0 : i32
    return %c0_i32, %c0_i32_0 : i32, i32
  }
  func.func @transform_3(%arg0: i32) -> (i32, i32) {
    %c0_i32 = arith.constant 0 : i32
    %c0_i32_0 = arith.constant 0 : i32
    %c0_i32_1 = arith.constant 0 : i32
    return %c0_i32, %c0_i32_0 : i32, i32
  }
  func.func @transform_4(%arg0: i32) -> (i32, i32) {
    %c0_i32 = arith.constant 0 : i32
    %c0_i32_0 = arith.constant 0 : i32
    %c0_i32_1 = arith.constant 0 : i32
    return %c0_i32, %c0_i32_0 : i32, i32
  }
  func.func @transform_5(%arg0: i32) -> (i32, i32) {
    %c0_i32 = arith.constant 0 : i32
    %c0_i32_0 = arith.constant 0 : i32
    %c0_i32_1 = arith.constant 0 : i32
    return %c0_i32, %c0_i32_0 : i32, i32
  }
  func.func @transform_6(%arg0: i32) -> (i32, i32) {
    %c0_i32 = arith.constant 0 : i32
    %c0_i32_0 = arith.constant 0 : i32
    %c0_i32_1 = arith.constant 0 : i32
    return %c0_i32, %c0_i32_0 : i32, i32
  }
  func.func @transform_7(%arg0: i32) -> (i32, i32) {
    %c0_i32 = arith.constant 0 : i32
    %c0_i32_0 = arith.constant 0 : i32
    %c0_i32_1 = arith.constant 0 : i32
    return %c0_i32, %c0_i32_0 : i32, i32
  }
  func.func @transform_8(%arg0: i32) -> (i32, i32) {
    %c0_i32 = arith.constant 0 : i32
    %c0_i32_0 = arith.constant 0 : i32
    return %arg0, %c0_i32 : i32, i32
  }
}

</mosaic_0001>

<llo_original>
// kernel: baseline_forward.1
$region0: #{baseline_forward.1}
  #allocation0 [shape = 'u32[]', space=smem, size = 0x4, offset = 0x4, fixed_abs, tag = 'smem constant byte address 0x4 - core index']
  #allocation1 [shape = 'u32[72,128]{1,0:T(1,128)}', space=vmem, size = 0x9000, scoped, tag = 'internal scratch']
  #allocation2 [shape = 'f32[1,1]{1,0:T(1,128)S(1)}', space=vmem, size = 0x200, scoped, tag = 'scoped memory for baseline_forward.1']
  %s0 = inlined_call_operand.hbm [shape: s32[8,8], index: 0, kind: input, shape index: {}]
  %s1 = inlined_call_operand.hbm [shape: f32[128,384], index: 1, kind: input, shape index: {}]
  %s2 = inlined_call_operand.hbm [shape: f32[384,256], index: 2, kind: input, shape index: {}]
  %s3 = inlined_call_operand.vmem [shape: f32[1,256], index: 3, kind: input, shape index: {}]
  %s4 = inlined_call_operand.hbm [shape: f32[256,256], index: 4, kind: input, shape index: {}]
  %s5 = inlined_call_operand.vmem [shape: f32[1,256], index: 5, kind: input, shape index: {}]
  %s6 = inlined_call_operand.vmem [shape: f32[1,256], index: 6, kind: input, shape index: {}]
  %s7 = inlined_call_operand.<no memory space> [shape: f32[1,1], index: 7, kind: input, shape index: {}]
  %s8 = inlined_call_operand.vmem [shape: f32[8,128], index: 8, kind: output, shape index: {}]
  %s9 = sld [smem:[#allocation0]]
  $region58: #{baseline_forward.1} parent=0
    _
  %s11 = ssub.s32 1, %s9
  %s12 = scalar_select 0, %s11, %s9
  %v13 = vstv %s7
  %14 = vst [vmem:[#allocation2] sm:$0x1] %v13
  $region1: #{baseline_forward.1} parent=0
    #allocation3 [shape = 'u8[4096]{0}', space=vmem, size = 0x1000, scoped, tag = 'input window, operand 0, single buffered']
    #allocation4 [shape = 's32[1]{0}', space=sflag, size = 0x4, scoped, tag = 'scoped memory for baseline_forward.1']
    #allocation5 [shape = 'u8[196608]{0}', space=vmem, size = 0x30000, scoped, tag = 'input window, operand 1, single buffered']
    #allocation6 [shape = 's32[1]{0}', space=sflag, size = 0x4, scoped, tag = 'scoped memory for baseline_forward.1']
    #allocation7 [shape = 'u8[393216]{0}', space=vmem, size = 0x60000, scoped, tag = 'input window, operand 2, single buffered']
    #allocation8 [shape = 'u8[262144]{0}', space=vmem, size = 0x40000, scoped, tag = 'input window, operand 4, single buffered']
    #allocation9 [shape = 's32[1]{0}', space=sflag, size = 0x4, scoped, tag = 'scoped memory for baseline_forward.1']
    %15 = vsyncpa [#allocation4], 0
    %16 = vsyncpa [#allocation6], 0
    %17 = vsyncpa [#allocation9], 0
    // Predicated region
    $region2: #{baseline_forward.1} parent=1 // pred_check
      _
    $region3: #{baseline_forward.1} parent=1 // pred_check_branch
      %19 = sbr.rel (0) target = $region5
    $region4: #{baseline_forward.1} parent=1 // pred_region
      %21 = vsyncadd [#allocation4], 0
      %s23 = sshll.u32 %s0, 4
      %s24 = int_to_ptr.hbm [resolvable:$true] %s23
      %s25 = sshll.u32 [#allocation3], 4
      %s26 = int_to_ptr.vmem [resolvable:$true] %s25
      %28 = dma.hbm_to_vmem [thread:$0]  %s24, 128, %s26, [#allocation4]
    $region5: #{baseline_forward.1} parent=1 // pred_fallthru
      _
    // Predicated region
    $region6: #{baseline_forward.1} parent=1 // pred_check
      _
    $region7: #{baseline_forward.1} parent=1 // pred_check_branch
      %30 = sbr.rel (0) target = $region9
    $region8: #{baseline_forward.1} parent=1 // pred_region
      %32 = vsyncadd [#allocation6], 0
      %s33 = sshll.u32 %s1, 4
      %s34 = int_to_ptr.hbm [resolvable:$true] %s33
      %s35 = sshll.u32 [#allocation5], 4
      %s36 = int_to_ptr.vmem [resolvable:$true] %s35
      %41 = dma.hbm_to_vmem [thread:$0]  %s34, 6144, %s36, [#allocation6], 384, 384, 24
    $region9: #{baseline_forward.1} parent=1 // pred_fallthru
      _
    // Predicated region
    $region10: #{baseline_forward.1} parent=1 // pred_check
      _
    $region11: #{baseline_forward.1} parent=1 // pred_check_branch
      %43 = sbr.rel (0) target = $region13
    $region12: #{baseline_forward.1} parent=1 // pred_region
      %45 = vsyncadd [#allocation6], 0
      %s46 = sshll.u32 %s2, 4
      %s47 = int_to_ptr.hbm [resolvable:$true] %s46
      %s48 = sshll.u32 [#allocation7], 4
      %s49 = int_to_ptr.vmem [resolvable:$true] %s48
      %54 = dma.hbm_to_vmem [thread:$0]  %s47, 12288, %s49, [#allocation6], 256, 256, 16
    $region13: #{baseline_forward.1} parent=1 // pred_fallthru
      _
    // Predicated region
    $region14: #{baseline_forward.1} parent=1 // pred_check
      _
    $region15: #{baseline_forward.1} parent=1 // pred_check_branch
      %56 = sbr.rel (0) target = $region17
    $region16: #{baseline_forward.1} parent=1 // pred_region
      _
    $region17: #{baseline_forward.1} parent=1 // pred_fallthru
      _
    // Predicated region
    $region18: #{baseline_forward.1} parent=1 // pred_check
      _
    $region19: #{baseline_forward.1} parent=1 // pred_check_branch
      %58 = sbr.rel (0) target = $region21
    $region20: #{baseline_forward.1} parent=1 // pred_region
      %60 = vsyncadd [#allocation9], 0
      %s61 = sshll.u32 %s4, 4
      %s62 = int_to_ptr.hbm [resolvable:$true] %s61
      %s63 = sshll.u32 [#allocation8], 4
      %s64 = int_to_ptr.vmem [resolvable:$true] %s63
      %69 = dma.hbm_to_vmem [thread:$0]  %s62, 8192, %s64, [#allocation9], 256, 256, 16
    $region21: #{baseline_forward.1} parent=1 // pred_fallthru
      _
    // Predicated region
    $region22: #{baseline_forward.1} parent=1 // pred_check
      _
    $region23: #{baseline_forward.1} parent=1 // pred_check_branch
      %71 = sbr.rel (0) target = $region25
    $region24: #{baseline_forward.1} parent=1 // pred_region
      _
    $region25: #{baseline_forward.1} parent=1 // pred_fallthru
      _
    // Predicated region
    $region26: #{baseline_forward.1} parent=1 // pred_check
      _
    $region27: #{baseline_forward.1} parent=1 // pred_check_branch
      %73 = sbr.rel (0) target = $region29
    $region28: #{baseline_forward.1} parent=1 // pred_region
      _
    $region29: #{baseline_forward.1} parent=1 // pred_fallthru
      _
    // Predicated region
    $region30: #{baseline_forward.1} parent=1 // pred_check
      _
    $region31: #{baseline_forward.1} parent=1 // pred_check_branch
      %75 = sbr.rel (0) target = $region33
    $region32: #{baseline_forward.1} parent=1 // pred_region
      _
    $region33: #{baseline_forward.1} parent=1 // pred_fallthru
      _
    // Predicated region
    $region34: #{baseline_forward.1} parent=1 // pred_check
      _
    $region35: #{baseline_forward.1} parent=1 // pred_check_branch
      %77 = sbr.rel (0) target = $region37
    $region36: #{baseline_forward.1} parent=1 // pred_region
      %79 = dma.done [#allocation4], 128
    $region37: #{baseline_forward.1} parent=1 // pred_fallthru
      _
    // Predicated region
    $region38: #{baseline_forward.1} parent=1 // pred_check
      _
    $region39: #{baseline_forward.1} parent=1 // pred_check_branch
      %81 = sbr.rel (0) target = $region41
    $region40: #{baseline_forward.1} parent=1 // pred_region
      %83 = dma.done [#allocation6], 6144
    $region41: #{baseline_forward.1} parent=1 // pred_fallthru
      _
    // Predicated region
    $region42: #{baseline_forward.1} parent=1 // pred_check
      _
    $region43: #{baseline_forward.1} parent=1 // pred_check_branch
      %85 = sbr.rel (0) target = $region45
    $region44: #{baseline_forward.1} parent=1 // pred_region
      %87 = dma.done [#allocation6], 12288
    $region45: #{baseline_forward.1} parent=1 // pred_fallthru
      _
    // Predicated region
    $region46: #{baseline_forward.1} parent=1 // pred_check
      _
    $region47: #{baseline_forward.1} parent=1 // pred_check_branch
      %89 = sbr.rel (0) target = $region49
    $region48: #{baseline_forward.1} parent=1 // pred_region
      %91 = dma.done [#allocation9], 8192
    $region49: #{baseline_forward.1} parent=1 // pred_fallthru
      _
    %v92 = vld [vmem:[#allocation3] sm:$0xff]
    %v93 = vlaneseq
    %v94 = vand.u32 %v93, 127
    %v95 = vperm.slane %v92, 0
    %v96 = vlaneseq
    %v97 = vshrl.u32 %v96, 7
    %99 = vset.pattern.permute.xlu0 %v97
    %100 = vperm.xlu0 %99, %v95
    %v101 = vpop.permute.xlu0 %100
    %v102 = vperm.slane %v92, 1
    %v103 = vlaneseq
    %v104 = vshrl.u32 %v103, 7
    %106 = vset.pattern.permute.xlu0 %v104
    %107 = vperm.xlu0 %106, %v102
    %v108 = vpop.permute.xlu0 %107
    %v109 = vperm.slane %v92, 2
    %v110 = vlaneseq
    %v111 = vshrl.u32 %v110, 7
    %113 = vset.pattern.permute.xlu0 %v111
    %114 = vperm.xlu0 %113, %v109
    %v115 = vpop.permute.xlu0 %114
    %v116 = vperm.slane %v92, 3
    %v117 = vlaneseq
    %v118 = vshrl.u32 %v117, 7
    %120 = vset.pattern.permute.xlu0 %v118
    %121 = vperm.xlu0 %120, %v116
    %v122 = vpop.permute.xlu0 %121
    %v123 = vperm.slane %v92, 4
    %v124 = vlaneseq
    %v125 = vshrl.u32 %v124, 7
    %127 = vset.pattern.permute.xlu0 %v125
    %128 = vperm.xlu0 %127, %v123
    %v129 = vpop.permute.xlu0 %128
    %v130 = vperm.slane %v92, 5
    %v131 = vlaneseq
    %v132 = vshrl.u32 %v131, 7
    %134 = vset.pattern.permute.xlu0 %v132
    %135 = vperm.xlu0 %134, %v130
    %v136 = vpop.permute.xlu0 %135
    %v137 = vperm.slane %v92, 6
    %v138 = vlaneseq
    %v139 = vshrl.u32 %v138, 7
    %141 = vset.pattern.permute.xlu0 %v139
    %142 = vperm.xlu0 %141, %v137
    %v143 = vpop.permute.xlu0 %142
    %v144 = vperm.slane %v92, 7
    %v145 = vlaneseq
    %v146 = vshrl.u32 %v145, 7
    %148 = vset.pattern.permute.xlu0 %v146
    %149 = vperm.xlu0 %148, %v144
    %v150 = vpop.permute.xlu0 %149
    %vm151 = vcmp.eq.s32.totalorder %v101, %v94
    %vm152 = vcmp.eq.s32.totalorder %v108, %v94
    %vm153 = vcmp.eq.s32.totalorder %v115, %v94
    %vm154 = vcmp.eq.s32.totalorder %v122, %v94
    %vm155 = vcmp.eq.s32.totalorder %v129, %v94
    %vm156 = vcmp.eq.s32.totalorder %v136, %v94
    %vm157 = vcmp.eq.s32.totalorder %v143, %v94
    %vm158 = vcmp.eq.s32.totalorder %v150, %v94
    %v159 = vsel %vm151, 1, 0
    %v160 = vsel %vm152, 1, 0
    %v161 = vsel %vm153, 1, 0
    %v162 = vsel %vm154, 1, 0
    %v163 = vsel %vm155, 1, 0
    %v164 = vsel %vm156, 1, 0
    %v165 = vsel %vm157, 1, 0
    %v166 = vsel %vm158, 1, 0
    %v167 = vcvt.s32.f32 %v159
    %v168 = vcvt.s32.f32 %v160
    %v169 = vcvt.s32.f32 %v161
    %v170 = vcvt.s32.f32 %v162
    %v171 = vcvt.s32.f32 %v163
    %v172 = vcvt.s32.f32 %v164
    %v173 = vcvt.s32.f32 %v165
    %v174 = vcvt.s32.f32 %v166
    %v175 = vrot.slane %v167, 4
    %v176 = vadd.f32 %v167, %v175
    %v177 = vrot.slane %v176, 2
    %v178 = vadd.f32 %v176, %v177
    %v179 = vrot.slane %v178, 1
    %v180 = vadd.f32 %v178, %v179
    %v181 = vrot.slane %v168, 4
    %v182 = vadd.f32 %v168, %v181
    %v183 = vrot.slane %v182, 2
    %v184 = vadd.f32 %v182, %v183
    %v185 = vrot.slane %v184, 1
    %v186 = vadd.f32 %v184, %v185
    %v187 = vrot.slane %v169, 4
    %v188 = vadd.f32 %v169, %v187
    %v189 = vrot.slane %v188, 2
    %v190 = vadd.f32 %v188, %v189
    %v191 = vrot.slane %v190, 1
    %v192 = vadd.f32 %v190, %v191
    %v193 = vrot.slane %v170, 4
    %v194 = vadd.f32 %v170, %v193
    %v195 = vrot.slane %v194, 2
    %v196 = vadd.f32 %v194, %v195
    %v197 = vrot.slane %v196, 1
    %v198 = vadd.f32 %v196, %v197
    %v199 = vrot.slane %v171, 4
    %v200 = vadd.f32 %v171, %v199
    %v201 = vrot.slane %v200, 2
    %v202 = vadd.f32 %v200, %v201
    %v203 = vrot.slane %v202, 1
    %v204 = vadd.f32 %v202, %v203
    %v205 = vrot.slane %v172, 4
    %v206 = vadd.f32 %v172, %v205
    %v207 = vrot.slane %v206, 2
    %v208 = vadd.f32 %v206, %v207
    %v209 = vrot.slane %v208, 1
    %v210 = vadd.f32 %v208, %v209
    %v211 = vrot.slane %v173, 4
    %v212 = vadd.f32 %v173, %v211
    %v213 = vrot.slane %v212, 2
    %v214 = vadd.f32 %v212, %v213
    %v215 = vrot.slane %v214, 1
    %v216 = vadd.f32 %v214, %v215
    %v217 = vrot.slane %v174, 4
    %v218 = vadd.f32 %v174, %v217
    %v219 = vrot.slane %v218, 2
    %v220 = vadd.f32 %v218, %v219
    %v221 = vrot.slane %v220, 1
    %v222 = vadd.f32 %v220, %v221
    %v223 = vmul.f32 %v180, 0.125
    %v224 = vmul.f32 %v186, 0.125
    %v225 = vmul.f32 %v192, 0.125
    %v226 = vmul.f32 %v198, 0.125
    %v227 = vmul.f32 %v204, 0.125
    %v228 = vmul.f32 %v210, 0.125
    %v229 = vmul.f32 %v216, 0.125
    %v230 = vmul.f32 %v222, 0.125
    %v231 = vld [vmem:[#allocation5] sm:$0xff]
    %v232 = vld [vmem:[#allocation5 + $0x8] sm:$0xff]
    %v233 = vld [vmem:[#allocation5 + $0x10] sm:$0xff]
    %v234 = vld [vmem:[#allocation5 + $0x18] sm:$0xff]
    %v235 = vld [vmem:[#allocation5 + $0x20] sm:$0xff]
    %v236 = vld [vmem:[#allocation5 + $0x28] sm:$0xff]
    %v237 = vld [vmem:[#allocation5 + $0x30] sm:$0xff]
    %v238 = vld [vmem:[#allocation5 + $0x38] sm:$0xff]
    %v239 = vld [vmem:[#allocation5 + $0x40] sm:$0xff]
    %v240 = vld [vmem:[#allocation5 + $0x48] sm:$0xff]
    %v241 = vld [vmem:[#allocation5 + $0x50] sm:$0xff]
    %v242 = vld [vmem:[#allocation5 + $0x58] sm:$0xff]
    %v243 = vld [vmem:[#allocation5 + $0x60] sm:$0xff]
    %v244 = vld [vmem:[#allocation5 + $0x68] sm:$0xff]
    %v245 = vld [vmem:[#allocation5 + $0x70] sm:$0xff]
    %v246 = vld [vmem:[#allocation5 + $0x78] sm:$0xff]
    %v247 = vld [vmem:[#allocation5 + $0x80] sm:$0xff]
    %v248 = vld [vmem:[#allocation5 + $0x88] sm:$0xff]
    %v249 = vld [vmem:[#allocation5 + $0x90] sm:$0xff]
    %v250 = vld [vmem:[#allocation5 + $0x98] sm:$0xff]
    %v251 = vld [vmem:[#allocation5 + $0xa0] sm:$0xff]
    %v252 = vld [vmem:[#allocation5 + $0xa8] sm:$0xff]
    %v253 = vld [vmem:[#allocation5 + $0xb0] sm:$0xff]
    %v254 = vld [vmem:[#allocation5 + $0xb8] sm:$0xff]
    %v255 = vld [vmem:[#allocation5 + $0xc0] sm:$0xff]
    %v256 = vld [vmem:[#allocation5 + $0xc8] sm:$0xff]
    %v257 = vld [vmem:[#allocation5 + $0xd0] sm:$0xff]
    %v258 = vld [vmem:[#allocation5 + $0xd8] sm:$0xff]
    %v259 = vld [vmem:[#allocation5 + $0xe0] sm:$0xff]
    %v260 = vld [vmem:[#allocation5 + $0xe8] sm:$0xff]
    %v261 = vld [vmem:[#allocation5 + $0xf0] sm:$0xff]
    %v262 = vld [vmem:[#allocation5 + $0xf8] sm:$0xff]
    %v263 = vld [vmem:[#allocation5 + $0x100] sm:$0xff]
    %v264 = vld [vmem:[#allocation5 + $0x108] sm:$0xff]
    %v265 = vld [vmem:[#allocation5 + $0x110] sm:$0xff]
    %v266 = vld [vmem:[#allocation5 + $0x118] sm:$0xff]
    %v267 = vld [vmem:[#allocation5 + $0x120] sm:$0xff]
    %v268 = vld [vmem:[#allocation5 + $0x128] sm:$0xff]
    %v269 = vld [vmem:[#allocation5 + $0x130] sm:$0xff]
    %v270 = vld [vmem:[#allocation5 + $0x138] sm:$0xff]
    %v271 = vld [vmem:[#allocation5 + $0x140] sm:$0xff]
    %v272 = vld [vmem:[#allocation5 + $0x148] sm:$0xff]
    %v273 = vld [vmem:[#allocation5 + $0x150] sm:$0xff]
    %v274 = vld [vmem:[#allocation5 + $0x158] sm:$0xff]
    %v275 = vld [vmem:[#allocation5 + $0x160] sm:$0xff]
    %v276 = vld [vmem:[#allocation5 + $0x168] sm:$0xff]
    %v277 = vld [vmem:[#allocation5 + $0x170] sm:$0xff]
    %v278 = vld [vmem:[#allocation5 + $0x178] sm:$0xff]
    %vm287 = vcmask 1041409
    %v288 = vsel %vm287, %v224, %v223
    %vm289 = vcmask 1042434
    %v290 = vsel %vm289, %v225, %v288
    %vm291 = vcmask 1043459
    %v292 = vsel %vm291, %v226, %v290
    %vm293 = vcmask 1044484
    %v294 = vsel %vm293, %v227, %v292
    %vm295 = vcmask 1045509
    %v296 = vsel %vm295, %v228, %v294
    %vm297 = vcmask 1046534
    %v298 = vsel %vm297, %v229, %v296
    %vm299 = vcmask 1047559
    %v300 = vsel %vm299, %v230, %v298
    %302 = vmatpush.msra.mxu0 %v276
    %303 = vmatpush.msra.mxu0 %v273
    %304 = vmatpush.msra.mxu0 %v270
    %305 = vmatpush.msra.mxu0 %v267
    %306 = vmatpush.msra.mxu0 %v264
    %307 = vmatpush.msra.mxu0 %v261
    %308 = vmatpush.msra.mxu0 %v258
    %309 = vmatpush.msra.mxu0 %v255
    %310 = vmatpush.msra.mxu0 %v252
    %311 = vmatpush.msra.mxu0 %v249
    %312 = vmatpush.msra.mxu0 %v246
    %313 = vmatpush.msra.mxu0 %v243
    %314 = vmatpush.msra.mxu0 %v240
    %315 = vmatpush.msra.mxu0 %v237
    %316 = vmatpush.msra.mxu0 %v234
    %317 = vmatpush.msra.mxu0 %v231
    %318 = vmatmul.f32.gmra.mxu0 %v300
    %v319 = vpop.f32.mrf.mxu0
    %v320 = vadd.f32 0.0, %v319
    %321 = vdwg.mxu0
    %322 = vmatpush.msra.mxu0 %v277
    %323 = vmatpush.msra.mxu0 %v274
    %324 = vmatpush.msra.mxu0 %v271
    %325 = vmatpush.msra.mxu0 %v268
    %326 = vmatpush.msra.mxu0 %v265
    %327 = vmatpush.msra.mxu0 %v262
    %328 = vmatpush.msra.mxu0 %v259
    %329 = vmatpush.msra.mxu0 %v256
    %330 = vmatpush.msra.mxu0 %v253
    %331 = vmatpush.msra.mxu0 %v250
    %332 = vmatpush.msra.mxu0 %v247
    %333 = vmatpush.msra.mxu0 %v244
    %334 = vmatpush.msra.mxu0 %v241
    %335 = vmatpush.msra.mxu0 %v238
    %336 = vmatpush.msra.mxu0 %v235
    %337 = vmatpush.msra.mxu0 %v232
    %338 = vmatmul.f32.gmra.mxu0 %v300
    %v339 = vpop.f32.mrf.mxu0
    %v340 = vadd.f32 0.0, %v339
    %341 = vdwg.mxu0
    %342 = vmatpush.msra.mxu0 %v278
    %343 = vmatpush.msra.mxu0 %v275
    %344 = vmatpush.msra.mxu0 %v272
    %345 = vmatpush.msra.mxu0 %v269
    %346 = vmatpush.msra.mxu0 %v266
    %347 = vmatpush.msra.mxu0 %v263
    %348 = vmatpush.msra.mxu0 %v260
    %349 = vmatpush.msra.mxu0 %v257
    %350 = vmatpush.msra.mxu0 %v254
    %351 = vmatpush.msra.mxu0 %v251
    %352 = vmatpush.msra.mxu0 %v248
    %353 = vmatpush.msra.mxu0 %v245
    %354 = vmatpush.msra.mxu0 %v242
    %355 = vmatpush.msra.mxu0 %v239
    %356 = vmatpush.msra.mxu0 %v236
    %357 = vmatpush.msra.mxu0 %v233
    %358 = vmatmul.f32.gmra.mxu0 %v300
    %v359 = vpop.f32.mrf.mxu0
    %v360 = vadd.f32 0.0, %v359
    %361 = vdwg.mxu0
    %v362 = vld [vmem:[#allocation7] sm:$0xff]
    %v363 = vld [vmem:[#allocation7 + $0x8] sm:$0xff]
    %v364 = vld [vmem:[#allocation7 + $0x10] sm:$0xff]
    %v365 = vld [vmem:[#allocation7 + $0x18] sm:$0xff]
    %v366 = vld [vmem:[#allocation7 + $0x20] sm:$0xff]
    %v367 = vld [vmem:[#allocation7 + $0x28] sm:$0xff]
    %v368 = vld [vmem:[#allocation7 + $0x30] sm:$0xff]
    %v369 = vld [vmem:[#allocation7 + $0x38] sm:$0xff]
    %v370 = vld [vmem:[#allocation7 + $0x40] sm:$0xff]
    %v371 = vld [vmem:[#allocation7 + $0x48] sm:$0xff]
    %v372 = vld [vmem:[#allocation7 + $0x50] sm:$0xff]
    %v373 = vld [vmem:[#allocation7 + $0x58] sm:$0xff]
    %v374 = vld [vmem:[#allocation7 + $0x60] sm:$0xff]
    %v375 = vld [vmem:[#allocation7 + $0x68] sm:$0xff]
    %v376 = vld [vmem:[#allocation7 + $0x70] sm:$0xff]
    %v377 = vld [vmem:[#allocation7 + $0x78] sm:$0xff]
    %v378 = vld [vmem:[#allocation7 + $0x80] sm:$0xff]
    %v379 = vld [vmem:[#allocation7 + $0x88] sm:$0xff]
    %v380 = vld [vmem:[#allocation7 + $0x90] sm:$0xff]
    %v381 = vld [vmem:[#allocation7 + $0x98] sm:$0xff]
    %v382 = vld [vmem:[#allocation7 + $0xa0] sm:$0xff]
    %v383 = vld [vmem:[#allocation7 + $0xa8] sm:$0xff]
    %v384 = vld [vmem:[#allocation7 + $0xb0] sm:$0xff]
    %v385 = vld [vmem:[#allocation7 + $0xb8] sm:$0xff]
    %v386 = vld [vmem:[#allocation7 + $0xc0] sm:$0xff]
    %v387 = vld [vmem:[#allocation7 + $0xc8] sm:$0xff]
    %v388 = vld [vmem:[#allocation7 + $0xd0] sm:$0xff]
    %v389 = vld [vmem:[#allocation7 + $0xd8] sm:$0xff]
    %v390 = vld [vmem:[#allocation7 + $0xe0] sm:$0xff]
    %v391 = vld [vmem:[#allocation7 + $0xe8] sm:$0xff]
    %v392 = vld [vmem:[#allocation7 + $0xf0] sm:$0xff]
    %v393 = vld [vmem:[#allocation7 + $0xf8] sm:$0xff]
    %v394 = vld [vmem:[#allocation7 + $0x100] sm:$0xff]
    %v395 = vld [vmem:[#allocation7 + $0x108] sm:$0xff]
    %v396 = vld [vmem:[#allocation7 + $0x110] sm:$0xff]
    %v397 = vld [vmem:[#allocation7 + $0x118] sm:$0xff]
    %v398 = vld [vmem:[#allocation7 + $0x120] sm:$0xff]
    %v399 = vld [vmem:[#allocation7 + $0x128] sm:$0xff]
    %v400 = vld [vmem:[#allocation7 + $0x130] sm:$0xff]
    %v401 = vld [vmem:[#allocation7 + $0x138] sm:$0xff]
    %v402 = vld [vmem:[#allocation7 + $0x140] sm:$0xff]
    %v403 = vld [vmem:[#allocation7 + $0x148] sm:$0xff]
    %v404 = vld [vmem:[#allocation7 + $0x150] sm:$0xff]
    %v405 = vld [vmem:[#allocation7 + $0x158] sm:$0xff]
    %v406 = vld [vmem:[#allocation7 + $0x160] sm:$0xff]
    %v407 = vld [vmem:[#allocation7 + $0x168] sm:$0xff]
    %v408 = vld [vmem:[#allocation7 + $0x170] sm:$0xff]
    %v409 = vld [vmem:[#allocation7 + $0x178] sm:$0xff]
    %v410 = vld [vmem:[#allocation7 + $0x180] sm:$0xff]
    %v411 = vld [vmem:[#allocation7 + $0x188] sm:$0xff]
    %v412 = vld [vmem:[#allocation7 + $0x190] sm:$0xff]
    %v413 = vld [vmem:[#allocation7 + $0x198] sm:$0xff]
    %v414 = vld [vmem:[#allocation7 + $0x1a0] sm:$0xff]
    %v415 = vld [vmem:[#allocation7 + $0x1a8] sm:$0xff]
    %v416 = vld [vmem:[#allocation7 + $0x1b0] sm:$0xff]
    %v417 = vld [vmem:[#allocation7 + $0x1b8] sm:$0xff]
    %v418 = vld [vmem:[#allocation7 + $0x1c0] sm:$0xff]
    %v419 = vld [vmem:[#allocation7 + $0x1c8] sm:$0xff]
    %v420 = vld [vmem:[#allocation7 + $0x1d0] sm:$0xff]
    %v421 = vld [vmem:[#allocation7 + $0x1d8] sm:$0xff]
    %v422 = vld [vmem:[#allocation7 + $0x1e0] sm:$0xff]
    %v423 = vld [vmem:[#allocation7 + $0x1e8] sm:$0xff]
    %v424 = vld [vmem:[#allocation7 + $0x1f0] sm:$0xff]
    %v425 = vld [vmem:[#allocation7 + $0x1f8] sm:$0xff]
    %v426 = vld [vmem:[#allocation7 + $0x200] sm:$0xff]
    %v427 = vld [vmem:[#allocation7 + $0x208] sm:$0xff]
    %v428 = vld [vmem:[#allocation7 + $0x210] sm:$0xff]
    %v429 = vld [vmem:[#allocation7 + $0x218] sm:$0xff]
    %v430 = vld [vmem:[#allocation7 + $0x220] sm:$0xff]
    %v431 = vld [vmem:[#allocation7 + $0x228] sm:$0xff]
    %v432 = vld [vmem:[#allocation7 + $0x230] sm:$0xff]
    %v433 = vld [vmem:[#allocation7 + $0x238] sm:$0xff]
    %v434 = vld [vmem:[#allocation7 + $0x240] sm:$0xff]
    %v435 = vld [vmem:[#allocation7 + $0x248] sm:$0xff]
    %v436 = vld [vmem:[#allocation7 + $0x250] sm:$0xff]
    %v437 = vld [vmem:[#allocation7 + $0x258] sm:$0xff]
    %v438 = vld [vmem:[#allocation7 + $0x260] sm:$0xff]
    %v439 = vld [vmem:[#allocation7 + $0x268] sm:$0xff]
    %v440 = vld [vmem:[#allocation7 + $0x270] sm:$0xff]
    %v441 = vld [vmem:[#allocation7 + $0x278] sm:$0xff]
    %v442 = vld [vmem:[#allocation7 + $0x280] sm:$0xff]
    %v443 = vld [vmem:[#allocation7 + $0x288] sm:$0xff]
    %v444 = vld [vmem:[#allocation7 + $0x290] sm:$0xff]
    %v445 = vld [vmem:[#allocation7 + $0x298] sm:$0xff]
    %v446 = vld [vmem:[#allocation7 + $0x2a0] sm:$0xff]
    %v447 = vld [vmem:[#allocation7 + $0x2a8] sm:$0xff]
    %v448 = vld [vmem:[#allocation7 + $0x2b0] sm:$0xff]
    %v449 = vld [vmem:[#allocation7 + $0x2b8] sm:$0xff]
    %v450 = vld [vmem:[#allocation7 + $0x2c0] sm:$0xff]
    %v451 = vld [vmem:[#allocation7 + $0x2c8] sm:$0xff]
    %v452 = vld [vmem:[#allocation7 + $0x2d0] sm:$0xff]
    %v453 = vld [vmem:[#allocation7 + $0x2d8] sm:$0xff]
    %v454 = vld [vmem:[#allocation7 + $0x2e0] sm:$0xff]
    %v455 = vld [vmem:[#allocation7 + $0x2e8] sm:$0xff]
    %v456 = vld [vmem:[#allocation7 + $0x2f0] sm:$0xff]
    %v457 = vld [vmem:[#allocation7 + $0x2f8] sm:$0xff]
    %v458 = vld [vmem:[%s3] sm:$0x3]
    %v460 = vperm.slane %v458, 0
    %v461 = vperm.slane %v458, 1
    %464 = vmatpush.msra.mxu0 %v392
    %465 = vmatpush.msra.mxu0 %v390
    %466 = vmatpush.msra.mxu0 %v388
    %467 = vmatpush.msra.mxu0 %v386
    %468 = vmatpush.msra.mxu0 %v384
    %469 = vmatpush.msra.mxu0 %v382
    %470 = vmatpush.msra.mxu0 %v380
    %471 = vmatpush.msra.mxu0 %v378
    %472 = vmatpush.msra.mxu0 %v376
    %473 = vmatpush.msra.mxu0 %v374
    %474 = vmatpush.msra.mxu0 %v372
    %475 = vmatpush.msra.mxu0 %v370
    %476 = vmatpush.msra.mxu0 %v368
    %477 = vmatpush.msra.mxu0 %v366
    %478 = vmatpush.msra.mxu0 %v364
    %479 = vmatpush.msra.mxu0 %v362
    %480 = vmatmul.f32.gmra.mxu0 %v320
    %v481 = vpop.f32.mrf.mxu0
    %v482 = vadd.f32 %v460, %v481
    %483 = vdwg.mxu0
    %484 = vmatpush.msra.mxu0 %v424
    %485 = vmatpush.msra.mxu0 %v422
    %486 = vmatpush.msra.mxu0 %v420
    %487 = vmatpush.msra.mxu0 %v418
    %488 = vmatpush.msra.mxu0 %v416
    %489 = vmatpush.msra.mxu0 %v414
    %490 = vmatpush.msra.mxu0 %v412
    %491 = vmatpush.msra.mxu0 %v410
    %492 = vmatpush.msra.mxu0 %v408
    %493 = vmatpush.msra.mxu0 %v406
    %494 = vmatpush.msra.mxu0 %v404
    %495 = vmatpush.msra.mxu0 %v402
    %496 = vmatpush.msra.mxu0 %v400
    %497 = vmatpush.msra.mxu0 %v398
    %498 = vmatpush.msra.mxu0 %v396
    %499 = vmatpush.msra.mxu0 %v394
    %500 = vmatmul.f32.gmra.mxu0 %v340
    %v501 = vpop.f32.mrf.mxu0
    %v502 = vadd.f32 %v482, %v501
    %503 = vdwg.mxu0
    %504 = vmatpush.msra.mxu0 %v456
    %505 = vmatpush.msra.mxu0 %v454
    %506 = vmatpush.msra.mxu0 %v452
    %507 = vmatpush.msra.mxu0 %v450
    %508 = vmatpush.msra.mxu0 %v448
    %509 = vmatpush.msra.mxu0 %v446
    %510 = vmatpush.msra.mxu0 %v444
    %511 = vmatpush.msra.mxu0 %v442
    %512 = vmatpush.msra.mxu0 %v440
    %513 = vmatpush.msra.mxu0 %v438
    %514 = vmatpush.msra.mxu0 %v436
    %515 = vmatpush.msra.mxu0 %v434
    %516 = vmatpush.msra.mxu0 %v432
    %517 = vmatpush.msra.mxu0 %v430
    %518 = vmatpush.msra.mxu0 %v428
    %519 = vmatpush.msra.mxu0 %v426
    %520 = vmatmul.f32.gmra.mxu0 %v360
    %v521 = vpop.f32.mrf.mxu0
    %v522 = vadd.f32 %v502, %v521
    %523 = vdwg.mxu0
    %524 = vmatpush.msra.mxu0 %v393
    %525 = vmatpush.msra.mxu0 %v391
    %526 = vmatpush.msra.mxu0 %v389
    %527 = vmatpush.msra.mxu0 %v387
    %528 = vmatpush.msra.mxu0 %v385
    %529 = vmatpush.msra.mxu0 %v383
    %530 = vmatpush.msra.mxu0 %v381
    %531 = vmatpush.msra.mxu0 %v379
    %532 = vmatpush.msra.mxu0 %v377
    %533 = vmatpush.msra.mxu0 %v375
    %534 = vmatpush.msra.mxu0 %v373
    %535 = vmatpush.msra.mxu0 %v371
    %536 = vmatpush.msra.mxu0 %v369
    %537 = vmatpush.msra.mxu0 %v367
    %538 = vmatpush.msra.mxu0 %v365
    %539 = vmatpush.msra.mxu0 %v363
    %540 = vmatmul.f32.gmra.mxu0 %v320
    %v541 = vpop.f32.mrf.mxu0
    %v542 = vadd.f32 %v461, %v541
    %543 = vdwg.mxu0
    %544 = vmatpush.msra.mxu0 %v425
    %545 = vmatpush.msra.mxu0 %v423
    %546 = vmatpush.msra.mxu0 %v421
    %547 = vmatpush.msra.mxu0 %v419
    %548 = vmatpush.msra.mxu0 %v417
    %549 = vmatpush.msra.mxu0 %v415
    %550 = vmatpush.msra.mxu0 %v413
    %551 = vmatpush.msra.mxu0 %v411
    %552 = vmatpush.msra.mxu0 %v409
    %553 = vmatpush.msra.mxu0 %v407
    %554 = vmatpush.msra.mxu0 %v405
    %555 = vmatpush.msra.mxu0 %v403
    %556 = vmatpush.msra.mxu0 %v401
    %557 = vmatpush.msra.mxu0 %v399
    %558 = vmatpush.msra.mxu0 %v397
    %559 = vmatpush.msra.mxu0 %v395
    %560 = vmatmul.f32.gmra.mxu0 %v340
    %v561 = vpop.f32.mrf.mxu0
    %v562 = vadd.f32 %v542, %v561
    %563 = vdwg.mxu0
    %564 = vmatpush.msra.mxu0 %v457
    %565 = vmatpush.msra.mxu0 %v455
    %566 = vmatpush.msra.mxu0 %v453
    %567 = vmatpush.msra.mxu0 %v451
    %568 = vmatpush.msra.mxu0 %v449
    %569 = vmatpush.msra.mxu0 %v447
    %570 = vmatpush.msra.mxu0 %v445
    %571 = vmatpush.msra.mxu0 %v443
    %572 = vmatpush.msra.mxu0 %v441
    %573 = vmatpush.msra.mxu0 %v439
    %574 = vmatpush.msra.mxu0 %v437
    %575 = vmatpush.msra.mxu0 %v435
    %576 = vmatpush.msra.mxu0 %v433
    %577 = vmatpush.msra.mxu0 %v431
    %578 = vmatpush.msra.mxu0 %v429
    %579 = vmatpush.msra.mxu0 %v427
    %580 = vmatmul.f32.gmra.mxu0 %v360
    %v581 = vpop.f32.mrf.mxu0
    %v582 = vadd.f32 %v562, %v581
    %583 = vdwg.mxu0
    %v584 = vmax.f32 %v522, 0.0
    %v585 = vmax.f32 %v582, 0.0
    %v586 = vld [vmem:[#allocation8] sm:$0xff]
    %v587 = vld [vmem:[#allocation8 + $0x8] sm:$0xff]
    %v588 = vld [vmem:[#allocation8 + $0x10] sm:$0xff]
    %v589 = vld [vmem:[#allocation8 + $0x18] sm:$0xff]
    %v590 = vld [vmem:[#allocation8 + $0x20] sm:$0xff]
    %v591 = vld [vmem:[#allocation8 + $0x28] sm:$0xff]
    %v592 = vld [vmem:[#allocation8 + $0x30] sm:$0xff]
    %v593 = vld [vmem:[#allocation8 + $0x38] sm:$0xff]
    %v594 = vld [vmem:[#allocation8 + $0x40] sm:$0xff]
    %v595 = vld [vmem:[#allocation8 + $0x48] sm:$0xff]
    %v596 = vld [vmem:[#allocation8 + $0x50] sm:$0xff]
    %v597 = vld [vmem:[#allocation8 + $0x58] sm:$0xff]
    %v598 = vld [vmem:[#allocation8 + $0x60] sm:$0xff]
    %v599 = vld [vmem:[#allocation8 + $0x68] sm:$0xff]
    %v600 = vld [vmem:[#allocation8 + $0x70] sm:$0xff]
    %v601 = vld [vmem:[#allocation8 + $0x78] sm:$0xff]
    %v602 = vld [vmem:[#allocation8 + $0x80] sm:$0xff]
    %v603 = vld [vmem:[#allocation8 + $0x88] sm:$0xff]
    %v604 = vld [vmem:[#allocation8 + $0x90] sm:$0xff]
    %v605 = vld [vmem:[#allocation8 + $0x98] sm:$0xff]
    %v606 = vld [vmem:[#allocation8 + $0xa0] sm:$0xff]
    %v607 = vld [vmem:[#allocation8 + $0xa8] sm:$0xff]
    %v608 = vld [vmem:[#allocation8 + $0xb0] sm:$0xff]
    %v609 = vld [vmem:[#allocation8 + $0xb8] sm:$0xff]
    %v610 = vld [vmem:[#allocation8 + $0xc0] sm:$0xff]
    %v611 = vld [vmem:[#allocation8 + $0xc8] sm:$0xff]
    %v612 = vld [vmem:[#allocation8 + $0xd0] sm:$0xff]
    %v613 = vld [vmem:[#allocation8 + $0xd8] sm:$0xff]
    %v614 = vld [vmem:[#allocation8 + $0xe0] sm:$0xff]
    %v615 = vld [vmem:[#allocation8 + $0xe8] sm:$0xff]
    %v616 = vld [vmem:[#allocation8 + $0xf0] sm:$0xff]
    %v617 = vld [vmem:[#allocation8 + $0xf8] sm:$0xff]
    %v618 = vld [vmem:[#allocation8 + $0x100] sm:$0xff]
    %v619 = vld [vmem:[#allocation8 + $0x108] sm:$0xff]
    %v620 = vld [vmem:[#allocation8 + $0x110] sm:$0xff]
    %v621 = vld [vmem:[#allocation8 + $0x118] sm:$0xff]
    %v622 = vld [vmem:[#allocation8 + $0x120] sm:$0xff]
    %v623 = vld [vmem:[#allocation8 + $0x128] sm:$0xff]
    %v624 = vld [vmem:[#allocation8 + $0x130] sm:$0xff]
    %v625 = vld [vmem:[#allocation8 + $0x138] sm:$0xff]
    %v626 = vld [vmem:[#allocation8 + $0x140] sm:$0xff]
    %v627 = vld [vmem:[#allocation8 + $0x148] sm:$0xff]
    %v628 = vld [vmem:[#allocation8 + $0x150] sm:$0xff]
    %v629 = vld [vmem:[#allocation8 + $0x158] sm:$0xff]
    %v630 = vld [vmem:[#allocation8 + $0x160] sm:$0xff]
    %v631 = vld [vmem:[#allocation8 + $0x168] sm:$0xff]
    %v632 = vld [vmem:[#allocation8 + $0x170] sm:$0xff]
    %v633 = vld [vmem:[#allocation8 + $0x178] sm:$0xff]
    %v634 = vld [vmem:[#allocation8 + $0x180] sm:$0xff]
    %v635 = vld [vmem:[#allocation8 + $0x188] sm:$0xff]
    %v636 = vld [vmem:[#allocation8 + $0x190] sm:$0xff]
    %v637 = vld [vmem:[#allocation8 + $0x198] sm:$0xff]
    %v638 = vld [vmem:[#allocation8 + $0x1a0] sm:$0xff]
    %v639 = vld [vmem:[#allocation8 + $0x1a8] sm:$0xff]
    %v640 = vld [vmem:[#allocation8 + $0x1b0] sm:$0xff]
    %v641 = vld [vmem:[#allocation8 + $0x1b8] sm:$0xff]
    %v642 = vld [vmem:[#allocation8 + $0x1c0] sm:$0xff]
    %v643 = vld [vmem:[#allocation8 + $0x1c8] sm:$0xff]
    %v644 = vld [vmem:[#allocation8 + $0x1d0] sm:$0xff]
    %v645 = vld [vmem:[#allocation8 + $0x1d8] sm:$0xff]
    %v646 = vld [vmem:[#allocation8 + $0x1e0] sm:$0xff]
    %v647 = vld [vmem:[#allocation8 + $0x1e8] sm:$0xff]
    %v648 = vld [vmem:[#allocation8 + $0x1f0] sm:$0xff]
    %v649 = vld [vmem:[#allocation8 + $0x1f8] sm:$0xff]
    %v650 = vld [vmem:[%s5] sm:$0x3]
    %v652 = vperm.slane %v650, 0
    %v653 = vperm.slane %v650, 1
    %656 = vmatpush.msra.mxu0 %v616
    %657 = vmatpush.msra.mxu0 %v614
    %658 = vmatpush.msra.mxu0 %v612
    %659 = vmatpush.msra.mxu0 %v610
    %660 = vmatpush.msra.mxu0 %v608
    %661 = vmatpush.msra.mxu0 %v606
    %662 = vmatpush.msra.mxu0 %v604
    %663 = vmatpush.msra.mxu0 %v602
    %664 = vmatpush.msra.mxu0 %v600
    %665 = vmatpush.msra.mxu0 %v598
    %666 = vmatpush.msra.mxu0 %v596
    %667 = vmatpush.msra.mxu0 %v594
    %668 = vmatpush.msra.mxu0 %v592
    %669 = vmatpush.msra.mxu0 %v590
    %670 = vmatpush.msra.mxu0 %v588
    %671 = vmatpush.msra.mxu0 %v586
    %672 = vmatmul.f32.gmra.mxu0 %v584
    %v673 = vpop.f32.mrf.mxu0
    %v674 = vadd.f32 %v652, %v673
    %675 = vdwg.mxu0
    %676 = vmatpush.msra.mxu0 %v648
    %677 = vmatpush.msra.mxu0 %v646
    %678 = vmatpush.msra.mxu0 %v644
    %679 = vmatpush.msra.mxu0 %v642
    %680 = vmatpush.msra.mxu0 %v640
    %681 = vmatpush.msra.mxu0 %v638
    %682 = vmatpush.msra.mxu0 %v636
    %683 = vmatpush.msra.mxu0 %v634
    %684 = vmatpush.msra.mxu0 %v632
    %685 = vmatpush.msra.mxu0 %v630
    %686 = vmatpush.msra.mxu0 %v628
    %687 = vmatpush.msra.mxu0 %v626
    %688 = vmatpush.msra.mxu0 %v624
    %689 = vmatpush.msra.mxu0 %v622
    %690 = vmatpush.msra.mxu0 %v620
    %691 = vmatpush.msra.mxu0 %v618
    %692 = vmatmul.f32.gmra.mxu0 %v585
    %v693 = vpop.f32.mrf.mxu0
    %v694 = vadd.f32 %v674, %v693
    %695 = vdwg.mxu0
    %696 = vmatpush.msra.mxu0 %v617
    %697 = vmatpush.msra.mxu0 %v615
    %698 = vmatpush.msra.mxu0 %v613
    %699 = vmatpush.msra.mxu0 %v611
    %700 = vmatpush.msra.mxu0 %v609
    %701 = vmatpush.msra.mxu0 %v607
    %702 = vmatpush.msra.mxu0 %v605
    %703 = vmatpush.msra.mxu0 %v603
    %704 = vmatpush.msra.mxu0 %v601
    %705 = vmatpush.msra.mxu0 %v599
    %706 = vmatpush.msra.mxu0 %v597
    %707 = vmatpush.msra.mxu0 %v595
    %708 = vmatpush.msra.mxu0 %v593
    %709 = vmatpush.msra.mxu0 %v591
    %710 = vmatpush.msra.mxu0 %v589
    %711 = vmatpush.msra.mxu0 %v587
    %712 = vmatmul.f32.gmra.mxu0 %v584
    %v713 = vpop.f32.mrf.mxu0
    %v714 = vadd.f32 %v653, %v713
    %715 = vdwg.mxu0
    %716 = vmatpush.msra.mxu0 %v649
    %717 = vmatpush.msra.mxu0 %v647
    %718 = vmatpush.msra.mxu0 %v645
    %719 = vmatpush.msra.mxu0 %v643
    %720 = vmatpush.msra.mxu0 %v641
    %721 = vmatpush.msra.mxu0 %v639
    %722 = vmatpush.msra.mxu0 %v637
    %723 = vmatpush.msra.mxu0 %v635
    %724 = vmatpush.msra.mxu0 %v633
    %725 = vmatpush.msra.mxu0 %v631
    %726 = vmatpush.msra.mxu0 %v629
    %727 = vmatpush.msra.mxu0 %v627
    %728 = vmatpush.msra.mxu0 %v625
    %729 = vmatpush.msra.mxu0 %v623
    %730 = vmatpush.msra.mxu0 %v621
    %731 = vmatpush.msra.mxu0 %v619
    %732 = vmatmul.f32.gmra.mxu0 %v585
    %v733 = vpop.f32.mrf.mxu0
    %v734 = vadd.f32 %v714, %v733
    %735 = vdwg.mxu0
    %v736 = vmax.f32 %v694, 0.0
    %v737 = vmax.f32 %v734, 0.0
    %v738 = vld [vmem:[%s6] sm:$0x3]
    %v740 = vperm.slane %v738, 0
    %v741 = vperm.slane %v738, 1
    %v744 = vmul.f32 %v736, %v740
    %v745 = vmul.f32 %v737, %v741
    %v746 = vadd.f32 %v744, %v745
    %747 = vadd.xlane.f32.xlu0 %v746
    %v748 = vpop.xlane.xlu0 %747
    %v749 = vld [vmem:[#allocation2] sm:$0x1]
    %v751 = vperm.slane %v749, 0
    %v753 = vadd.f32 %v748, %v751
    %755 = vset.pattern.permute.xlu0 0
    %756 = vperm.xlu0 %755, %v753
    %v757 = vpop.permute.xlu0 %756
    %759 = vst [vmem:[%s8] sm:$0xff] %v757
    // Predicated region
    $region50: #{baseline_forward.1} parent=1 // pred_check
      _
    $region51: #{baseline_forward.1} parent=1 // pred_check_branch
      %761 = sbr.rel (0) target = $region53
    $region52: #{baseline_forward.1} parent=1 // pred_region
      _
    $region53: #{baseline_forward.1} parent=1 // pred_fallthru
      _
    // Predicated region
    $region54: #{baseline_forward.1} parent=1 // pred_check
      _
    $region55: #{baseline_forward.1} parent=1 // pred_check_branch
      %763 = sbr.rel (0) target = $region57
    $region56: #{baseline_forward.1} parent=1 // pred_region
      _
    $region57: #{baseline_forward.1} parent=1 // pred_fallthru
      _
    %764 = vsyncpa [#allocation4], 1
    %765 = vsyncpa [#allocation6], 1
    %766 = vsyncpa [#allocation9], 1

</llo_original>
